<compile_context>
chip_gen: v7x
topology: tpu7x:2x2x1
jax: 0.10.0
libtpu: 0.0.40
codegen_flags: <defaults>
</compile_context>

<pallas_src>
import math

import numpy as np
import jax
import jax.numpy as jnp
from jax.experimental import pallas as pl
from jax.experimental.pallas import tpu as pltpu

LANE = 128
_TARGET_BLOCK_BYTES = 4 << 20     # ~4 MiB x-block: amortizes ~0.35us/step on every gen
_SMALL_TOTAL_BYTES = 8 << 20      # below this (padded), just run one full block
_MAX_FOOTPRINT_BYTES = 40 << 20   # hard cap on padded, double-buffered VMEM use


def build_pe_table(d_model: int, max_seq_len: int = 80) -> np.ndarray:
    """Reproduces the PyTorch __init__ loop exactly.

    NOTE: intentionally keeps the tutorial's cos exponent 2*(i+1)/d_model (not the
    standard Vaswani 2*i/d_model) to match the reference module bit-for-bit.
    """
    assert d_model % 2 == 0, "PositionalEncoder requires an even d_model"
    pe = np.zeros((max_seq_len, d_model), dtype=np.float32)
    for pos in range(max_seq_len):
        for i in range(0, d_model, 2):
            pe[pos, i] = math.sin(pos / 10000 ** (2 * i / d_model))
            pe[pos, i + 1] = math.cos(pos / 10000 ** (2 * (i + 1) / d_model))
    return pe


def _round_up(x: int, m: int) -> int:
    return (x + m - 1) // m * m


def _sublane_unit(itemsize: int) -> int:
    # rows per 32-bit sublane-packed tile: f32 -> 8, bf16 -> 16, int8/fp8 -> 32
    return {4: 8, 2: 16, 1: 32}.get(itemsize, 8)


def _scale_add_kernel(scale: float):
    def body(x_ref, pe_ref, o_ref):
        # f32 math regardless of input dtype (free: kernel is HBM bound), matching
        # the f32 PyTorch reference even for bf16 activations.
        x = x_ref[...].astype(jnp.float32)
        pe = pe_ref[...].astype(jnp.float32)
        o_ref[...] = (x * scale + pe).astype(o_ref.dtype)
    return body


def _pick_tile(cands_desc, grid_of):
    """Largest tile whose grid keeps both v7x TensorCores busy and balanced."""
    for ok in (lambda g: g >= 2 and g % 2 == 0,   # even grid >= 2: balanced megacore
               lambda g: g >= 2,                  # both cores busy
               lambda g: True):                   # fall back to largest tile
        for t in cands_desc:
            if ok(grid_of(t)):
                return t
    return None


def _plan_lane_dense(B, F, itemsize, target_block_bytes):
    """Full-sublane, lane-dense plan: x/out viewed as (B*F//L, L), pe as (F//L, L)."""
    if F % LANE != 0:
        return None
    su = _sublane_unit(itemsize)
    # Any multiple of 128 gives unmasked stores and contiguous per-block DMA; take
    # the biggest "nice" one.
    L = next(l for l in (1024, 512, 256, 128) if F % l == 0)
    Rp = F // L                      # rows holding one batch's worth (== pe rows)
    # Tile rows: multiple of the sublane unit (zero sublane-padding waste) AND a
    # divisor of Rp (every x block sits inside one batch, aligned to a pe block).
    cands = [t for t in range(su, Rp + 1, su) if Rp % t == 0]
    if not cands:
        return None
    fitting = [t for t in cands if t * L * itemsize <= target_block_bytes]
    cands = sorted(fitting if fitting else cands[:1], reverse=True)
    tile_r = _pick_tile(cands, lambda t: B * (Rp // t))
    blk = tile_r * L
    # Physical double-buffered footprint: x + out blocks (input dtype) + pe (f32).
    footprint = 2 * blk * itemsize + 2 * blk * itemsize + 2 * blk * 4
    if footprint > _MAX_FOOTPRINT_BYTES:
        return None
    return dict(kind="lane_dense", L=L, Rp=Rp, R=B * Rp, tile_r=tile_r,
                pe_blocks=Rp // tile_r, footprint=footprint)


def _plan_small(B, S, D, itemsize):
    """Whole problem in one block (tiny or awkward-but-small shapes)."""
    F = S * D
    Fp = _round_up(F, LANE)
    bytes_x = _round_up(B, _sublane_unit(itemsize)) * Fp * itemsize
    bytes_pe = 8 * Fp * 4
    footprint = 2 * bytes_x + 2 * bytes_x + 2 * bytes_pe
    if footprint > _SMALL_TOTAL_BYTES:
        return None
    return dict(kind="small", footprint=footprint)


def _plan_padded_rows(B, S, D, itemsize, target_block_bytes):
    """General fallback: (B*S, D) rows padded to sublane/lane multiples, row-tiled.

    pe is pre-broadcast over the batch (extra pe reads; acceptable for the
    awkward-shape fallback only)."""
    su = _sublane_unit(itemsize)
    rows = B * S
    rows_p = _round_up(rows, su)
    Dp = _round_up(D, LANE)
    cands = [t for t in range(su, rows_p + 1, su)
             if rows_p % t == 0 and t * Dp * itemsize <= target_block_bytes]
    if not cands:
        cands = [su]
    cands = sorted(cands, reverse=True)
    tile_r = _pick_tile(cands, lambda t: rows_p // t)
    blk = tile_r * Dp
    footprint = 2 * blk * itemsize + 2 * blk * itemsize + 2 * blk * 4
    # TODO(synk): for pathologically large D (a single padded row-block exceeding
    # VMEM) the lane dimension would need tiling as well.
    return dict(kind="padded_rows", rows=rows, rows_p=rows_p, Dp=Dp,
                tile_r=tile_r, footprint=footprint)


def positional_encoder(x, pe_full, d_model, *, donate_x=False,
                       target_block_bytes=_TARGET_BLOCK_BYTES, _force_path=None):
    """x: (B, S, D); pe_full: (max_seq_len, D) float32. Returns x*sqrt(D) + pe[:S]."""
    B, S, D = x.shape
    assert D == d_model
    assert S <= pe_full.shape[0]
    scale = math.sqrt(d_model)
    itemsize = jnp.dtype(x.dtype).itemsize
    F = S * D
    pe32 = pe_full[:S, :].astype(jnp.float32)   # pe stays f32: f32 math in-kernel

    if _force_path == "lane_dense":
        plan = _plan_lane_dense(B, F, itemsize, target_block_bytes)
    elif _force_path == "small":
        plan = _plan_small(B, S, D, itemsize)
    elif _force_path == "padded_rows":
        plan = _plan_padded_rows(B, S, D, itemsize, target_block_bytes)
    else:
        plan = (_plan_lane_dense(B, F, itemsize, target_block_bytes)
                or _plan_small(B, S, D, itemsize)
                or _plan_padded_rows(B, S, D, itemsize, target_block_bytes))
    if plan is None:
        raise ValueError(f"no valid plan for forced path {_force_path!r}")

    kernel = _scale_add_kernel(scale)
    cost = pl.CostEstimate(flops=2 * B * F, transcendentals=0,
                           bytes_accessed=2 * B * F * itemsize + F * 4)
    # Explicit VMEM limit derived from the *padded* double-buffered footprint
    # (independent of the 16 MiB v5e / 32 MiB v6e-v7x scoped defaults), kept under
    # v7x's 64 MiB per-TensorCore physical VMEM.
    vlim = int(min(max(plan["footprint"] * 3 // 2 + (4 << 20), 16 << 20), 48 << 20))
    io_alias = {0: 0} if donate_x else {}

    def call(x2, pe2, out_shape, grid, in_specs, out_spec, dims, alias):
        return pl.pallas_call(
            kernel,
            out_shape=out_shape,
            grid_spec=pl.GridSpec(grid=grid, in_specs=in_specs, out_specs=out_spec),
            compiler_params=pltpu.CompilerParams(
                dimension_semantics=dims, vmem_limit_bytes=vlim),
            cost_estimate=cost,
            input_output_aliases=alias,
        )(x2, pe2)

    if plan["kind"] == "lane_dense":
        L, Rp, R = plan["L"], plan["Rp"], plan["R"]
        tile_r, pe_blocks = plan["tile_r"], plan["pe_blocks"]
        x2 = x.reshape(R, L)
        pe2 = pe32.reshape(Rp, L)
        if pe_blocks == 1:
            # pe resident: constant block index -> DMA'd once, stays in VMEM.
            grid = (R // tile_r,)
            in_specs = [pl.BlockSpec((tile_r, L), lambda i: (i, 0)),
                        pl.BlockSpec((tile_r, L), lambda i: (0, 0))]
            out_spec = pl.BlockSpec((tile_r, L), lambda i: (i, 0))
            dims = ("parallel",)
        else:
            # pe-block axis OUTER so each pe tile stays resident across the inner
            # batch loop -> pe still read only once in total.
            grid = (pe_blocks, B)
            x_map = lambda j, b: (b * pe_blocks + j, 0)
            in_specs = [pl.BlockSpec((tile_r, L), x_map),
                        pl.BlockSpec((tile_r, L), lambda j, b: (j, 0))]
            out_spec = pl.BlockSpec((tile_r, L), x_map)
            dims = ("parallel", "parallel")
        out2 = call(x2, pe2, jax.ShapeDtypeStruct((R, L), x.dtype),
                    grid, in_specs, out_spec, dims, io_alias)
        return out2.reshape(B, S, D)

    if plan["kind"] == "small":
        x2 = x.reshape(B, F)
        pe2 = pe32.reshape(1, F)
        out2 = call(x2, pe2, jax.ShapeDtypeStruct((B, F), x.dtype),
                    (1,),
                    [pl.BlockSpec((B, F), lambda i: (0, 0)),
                     pl.BlockSpec((1, F), lambda i: (0, 0))],
                    pl.BlockSpec((B, F), lambda i: (0, 0)),
                    ("parallel",), io_alias)
        return out2.reshape(B, S, D)

    # padded_rows fallback (F not a multiple of 128 and too big for one block, or
    # no full-sublane tiling exists for the lane-dense layout).
    rows, rows_p, Dp, tile_r = plan["rows"], plan["rows_p"], plan["Dp"], plan["tile_r"]
    pad = ((0, rows_p - rows), (0, Dp - D))
    x2 = jnp.pad(x.reshape(rows, D), pad)
    pe2 = jnp.pad(jnp.broadcast_to(pe32[None], (B, S, D)).reshape(rows, D), pad)
    out2 = call(x2, pe2, jax.ShapeDtypeStruct((rows_p, Dp), x.dtype),
                (rows_p // tile_r,),
                [pl.BlockSpec((tile_r, Dp), lambda i: (i, 0)),
                 pl.BlockSpec((tile_r, Dp), lambda i: (i, 0))],
                pl.BlockSpec((tile_r, Dp), lambda i: (i, 0)),
                ("parallel",), {})
    return out2[:rows, :D].reshape(B, S, D)


if __name__ == "__main__":
    max_seq_len = 80
    cases = [
        # (B, S, D, dtype, force_path, target_block_bytes)
        (2, 8, 32, jnp.float32, None, None),           # tiny -> single full block
        (2, 64, 512, jnp.float32, None, None),         # lane-dense, resident pe, even grid
        (2, 64, 512, jnp.bfloat16, None, None),        # bf16 input, f32 math in-kernel
        (2, 64, 512, jnp.float32, None, 64 << 10),     # small block budget -> 2D grid, pe outer
        (2, 8, 40, jnp.float32, "padded_rows", None),  # non-128-multiple fallback path
    ]
    keys = jax.random.split(jax.random.PRNGKey(0), len(cases))
    for kk, (B, S, D, dtype, force, tbb) in zip(keys, cases):
        pe_full = jnp.asarray(build_pe_table(D, max_seq_len))
        x = jax.random.normal(kk, (B, S, D), dtype=jnp.float32).astype(dtype)
        kwargs = dict(_force_path=force)
        if tbb is not None:
            kwargs["target_block_bytes"] = tbb
        out = positional_encoder(x, pe_full, D, **kwargs)
        out = jax.block_until_ready(out)

        ref = (x.astype(jnp.float32) * math.sqrt(D) + pe_full[None, :S, :]).astype(dtype)
        out_f = np.asarray(out.astype(jnp.float32))
        ref_f = np.asarray(ref.astype(jnp.float32))
        if dtype == jnp.float32:
            np.testing.assert_allclose(out_f, ref_f, rtol=1e-6, atol=1e-6)
        else:
            np.testing.assert_allclose(out_f, ref_f, rtol=1e-2, atol=1e-2)
    print("KERNEL_OK")
</pallas_src>

<mosaic_0001>
module attributes {stable_mosaic.version = 11 : i64} {
  func.func @body(%arg0: i32, %arg1: memref<2x256xf32, #tpu.memory_space<vmem>>, %arg2: memref<1x256xf32, #tpu.memory_space<vmem>>, %arg3: memref<2x256xf32, #tpu.memory_space<vmem>>) attributes {dimension_semantics = [#tpu.dimension_semantics<parallel>], iteration_bounds = array<i64: 1>, scalar_prefetch = 0 : i64, scratch_operands = 0 : i64, tpu.core_type = #tpu.core_type<tc>, window_params = [{pipeline_mode = #tpu.pipeline_mode<synchronous>, transform_indices = @transform_0, window_bounds = array<i64: 2, 256>}, {pipeline_mode = #tpu.pipeline_mode<synchronous>, transform_indices = @transform_1, window_bounds = array<i64: 1, 256>}, {pipeline_mode = #tpu.pipeline_mode<synchronous>, transform_indices = @transform_2, window_bounds = array<i64: 2, 256>}]} {
    %c0 = arith.constant 0 : index
    %c0_0 = arith.constant 0 : index
    %0 = vector.load %arg1[%c0, %c0_0] : memref<2x256xf32, #tpu.memory_space<vmem>>, vector<2x256xf32>
    %c0_1 = arith.constant 0 : index
    %c0_2 = arith.constant 0 : index
    %1 = vector.load %arg2[%c0_1, %c0_2] : memref<1x256xf32, #tpu.memory_space<vmem>>, vector<1x256xf32>
    %cst = arith.constant 5.65685415 : f32
    %2 = vector.broadcast %cst : f32 to vector<2x256xf32>
    %3 = arith.mulf %0, %2 : vector<2x256xf32>
    %4 = vector.broadcast %1 : vector<1x256xf32> to vector<2x256xf32>
    %5 = arith.addf %3, %4 : vector<2x256xf32>
    %c0_3 = arith.constant 0 : index
    %c0_4 = arith.constant 0 : index
    %6 = vector.load %arg3[%c0_3, %c0_4] : memref<2x256xf32, #tpu.memory_space<vmem>>, vector<2x256xf32>
    tpu.vector_store %arg3[%c0_3, %c0_4], %5 {strides = array<i32>} : memref<2x256xf32, #tpu.memory_space<vmem>>, vector<2x256xf32>,
    return
  }
  func.func @transform_0(%arg0: i32) -> (i32, i32) {
    %c0_i32 = arith.constant 0 : i32
    %c0_i32_0 = arith.constant 0 : i32
    %c0_i32_1 = arith.constant 0 : i32
    return %c0_i32, %c0_i32_0 : i32, i32
  }
  func.func @transform_1(%arg0: i32) -> (i32, i32) {
    %c0_i32 = arith.constant 0 : i32
    %c0_i32_0 = arith.constant 0 : i32
    %c0_i32_1 = arith.constant 0 : i32
    return %c0_i32, %c0_i32_0 : i32, i32
  }
  func.func @transform_2(%arg0: i32) -> (i32, i32) {
    %c0_i32 = arith.constant 0 : i32
    %c0_i32_0 = arith.constant 0 : i32
    %c0_i32_1 = arith.constant 0 : i32
    return %c0_i32, %c0_i32_0 : i32, i32
  }
}

</mosaic_0001>

<llo_original>
// kernel: tpu_custom_call.1
$region0: #{tpu_custom_call.1}
  #allocation0 [shape = 'u32[]', space=smem, size = 0x4, offset = 0x4, fixed_abs, tag = 'smem constant byte address 0x4 - core index']
  #allocation1 [shape = 'u32[144,128]{1,0:T(1,128)}', space=vmem, size = 0x12000, scoped, tag = 'internal scratch']
  %s0 = inlined_call_operand.hbm [shape: f32[2,256], index: 0, kind: input, shape index: {}]
  %s1 = inlined_call_operand.vmem [shape: f32[1,256], index: 1, kind: input, shape index: {}]
  %s2 = inlined_call_operand.hbm [shape: f32[2,256], index: 2, kind: output, shape index: {}]
  %s3 = sld [smem:[#allocation0]]
  $region22: #{tpu_custom_call.1} parent=0
    _
  %s5 = ssub.s32 1, %s3
  %s6 = scalar_select 0, %s5, %s3
  $region1: #{tpu_custom_call.1} parent=0
    #allocation2 [shape = 'u8[2048]{0}', space=vmem, size = 0x800, scoped, tag = 'input window, operand 0, single buffered']
    #allocation3 [shape = 's32[1]{0}', space=sflag, size = 0x4, scoped, tag = 'scoped memory for tpu_custom_call.1']
    #allocation4 [shape = 's32[1]{0}', space=sflag, size = 0x4, scoped, tag = 'scoped memory for tpu_custom_call.1']
    #allocation5 [shape = 'u8[2048]{0}', space=vmem, size = 0x800, scoped, tag = 'output window, operand 0, single buffered']
    %7 = vsyncpa [#allocation3], 0
    %8 = vsyncpa [#allocation4], 0
    // Predicated region
    $region2: #{tpu_custom_call.1} parent=1 // pred_check
      _
    $region3: #{tpu_custom_call.1} parent=1 // pred_check_branch
      %10 = sbr.rel (0) target = $region5
    $region4: #{tpu_custom_call.1} parent=1 // pred_region
      %s12 = ssub.s32 64, 64
      %13 = vsyncadd [#allocation3], %s12
      %s15 = sshll.u32 [#allocation2], 4
      %s16 = int_to_ptr.vmem [resolvable:$true] %s15
      %18 = dma.hbm_to_vmem [thread:$0]  %s0, 64, %s16, [#allocation3]
    $region5: #{tpu_custom_call.1} parent=1 // pred_fallthru
      _
    // Predicated region
    $region6: #{tpu_custom_call.1} parent=1 // pred_check
      _
    $region7: #{tpu_custom_call.1} parent=1 // pred_check_branch
      %20 = sbr.rel (0) target = $region9
    $region8: #{tpu_custom_call.1} parent=1 // pred_region
      _
    $region9: #{tpu_custom_call.1} parent=1 // pred_fallthru
      _
    // Predicated region
    $region10: #{tpu_custom_call.1} parent=1 // pred_check
      _
    $region11: #{tpu_custom_call.1} parent=1 // pred_check_branch
      %22 = sbr.rel (0) target = $region13
    $region12: #{tpu_custom_call.1} parent=1 // pred_region
      %23 = dma.done [#allocation3], 64
    $region13: #{tpu_custom_call.1} parent=1 // pred_fallthru
      _
    %v24 = vld [vmem:[#allocation2] sm:$0xf]
    %v25 = vld [vmem:[%s1] sm:$0x3]
    %v26 = vmul.f32 %v24, 5.656854
    %v28 = vlaneseq
    %v29 = vshrl.u32 %v28, 7
    %v30 = vsub.s32 0, %v29
    %v31 = vrot.slane %v25, %v30
    %v32 = vlaneseq
    %v33 = vshrl.u32 %v32, 7
    %v34 = vsub.s32 1, %v33
    %v35 = vrot.slane %v25, %v34
    %v36 = vcombine.low %v31, %v35
    %v38 = vunpack.c.l.s4 1983009808
    %v39 = vunpack.c.0.s8 %v38
    %v40 = vlaneseq
    %v41 = vshrl.u32 %v40, 7
    %v42 = vsub.s32 %v39, %v41
    %v43 = vrot.slane %v36, %v42
    %v45 = vadd.f32 %v26, %v43
    %46 = vst [vmem:[#allocation5] sm:$0xf] %v45
    // Predicated region
    $region14: #{tpu_custom_call.1} parent=1 // pred_check
      _
    $region15: #{tpu_custom_call.1} parent=1 // pred_check_branch
      %48 = sbr.rel (0) target = $region17
    $region16: #{tpu_custom_call.1} parent=1 // pred_region
      %s50 = ssub.s32 64, 64
      %51 = vsyncadd [#allocation4], %s50
      %s53 = sshll.u32 [#allocation5], 4
      %s54 = int_to_ptr.vmem [resolvable:$true] %s53
      %56 = dma.vmem_to_hbm [thread:$0]  %s54, 64, %s2, [#allocation4]
    $region17: #{tpu_custom_call.1} parent=1 // pred_fallthru
      _
    // Predicated region
    $region18: #{tpu_custom_call.1} parent=1 // pred_check
      _
    $region19: #{tpu_custom_call.1} parent=1 // pred_check_branch
      %58 = sbr.rel (0) target = $region21
    $region20: #{tpu_custom_call.1} parent=1 // pred_region
      %59 = dma.done [#allocation4], 64
    $region21: #{tpu_custom_call.1} parent=1 // pred_fallthru
      _
    %60 = vsyncpa [#allocation3], 1
    %61 = vsyncpa [#allocation4], 1

</llo_original>
